<compile_context>
chip_gen: v5e
topology: v5e:2x2
jax: 0.10.0
libtpu: 0.0.40
codegen_flags: <defaults>
</compile_context>

<pallas_src>
import functools
import math

import jax
import jax.numpy as jnp
from jax.experimental import pallas as pl
from jax.experimental.pallas import tpu as pltpu

EPS = 1e-5  # nn.LayerNorm default


# ------------------------------ Pallas kernel -------------------------------

def _erf(z):
    # Abramowitz & Stegun 7.1.26 (|err| <= 1.5e-7): exact-erf GELU without relying on an
    # erf primitive in the Mosaic lowering (only exp / mul / add / select / div).
    a1, a2, a3, a4, a5 = 0.254829592, -0.284496736, 1.421413741, -1.453152027, 1.061405429
    p = 0.3275911
    s = jnp.where(z < 0.0, -1.0, 1.0)
    az = jnp.abs(z)
    t = 1.0 / (1.0 + p * az)
    poly = ((((a5 * t + a4) * t + a3) * t + a2) * t + a1) * t
    return s * (1.0 - poly * jnp.exp(-az * az))


def _gelu_exact(x):
    return 0.5 * x * (1.0 + _erf(x * 0.7071067811865476))


def _layernorm_no_affine(v):
    # gamma/beta are folded into the following linear at trace time.
    mu = jnp.mean(v, axis=-1, keepdims=True)
    c = v - mu
    var = jnp.mean(c * c, axis=-1, keepdims=True)
    return c * jax.lax.rsqrt(var + EPS)


def _block_kernel(x_ref, wqkv_ref, bqkv_ref, wp_ref, bp_ref,
                  w1_ref, b1_ref, w2_ref, b2_ref, o_ref, *, heads):
    x = x_ref[0].astype(jnp.float32)                    # [T, d] residual stream (fp32)
    T, d = x.shape
    kd = d // heads
    scale = 1.0 / math.sqrt(kd)

    # ---- attention branch: inner = x + proj(MHA(LN1(x)))   (LN1 affine folded into Wqkv)
    h1 = _layernorm_no_affine(x).astype(jnp.bfloat16)
    qkv = jnp.dot(h1, wqkv_ref[...], preferred_element_type=jnp.float32) + bqkv_ref[...]

    wp = wp_ref[...]                                    # [d, d] bf16
    inner = x + bp_ref[...]                             # residual + proj bias (added once)
    for hh in range(heads):                             # static unroll over heads
        q = (qkv[:, hh * kd:(hh + 1) * kd] * scale).astype(jnp.bfloat16)
        k = qkv[:, d + hh * kd:d + (hh + 1) * kd].astype(jnp.bfloat16)
        v = qkv[:, 2 * d + hh * kd:2 * d + (hh + 1) * kd].astype(jnp.bfloat16)
        s = jax.lax.dot_general(q, k, (((1,), (1,)), ((), ())),
                                preferred_element_type=jnp.float32)     # [T, T] = Q K^T
        s = s - jnp.max(s, axis=-1, keepdims=True)
        p = jnp.exp(s)
        p = p * pl.reciprocal(jnp.sum(p, axis=-1, keepdims=True), approx=True)
        o_h = jnp.dot(p.astype(jnp.bfloat16), v, preferred_element_type=jnp.float32)
        # per-head row-slice of Wp == concat(heads) @ Wp, without materializing a concat
        inner = inner + jnp.dot(o_h.astype(jnp.bfloat16),
                                wp[hh * kd:(hh + 1) * kd, :],
                                preferred_element_type=jnp.float32)

    # ---- MLP branch: out = x + fc2(GELU(fc1(LN2(inner))))   (LN2 affine folded into W1)
    h2 = _layernorm_no_affine(inner).astype(jnp.bfloat16)
    m = jnp.dot(h2, w1_ref[...], preferred_element_type=jnp.float32) + b1_ref[...]
    m = _gelu_exact(m).astype(jnp.bfloat16)
    out = x + jnp.dot(m, w2_ref[...], preferred_element_type=jnp.float32) + b2_ref[...]
    o_ref[0] = out.astype(o_ref.dtype)


# --------------------------------- wrapper ----------------------------------

def block_forward(params, x, *, heads):
    """x: [B, T, d] fp32 -> [B, T, d] fp32 (matches PyTorch Block.forward in eval mode)."""
    B, T, d = x.shape
    g1, be1 = params["ln1"]
    g2, be2 = params["ln2"]
    wqkv, bqkv = params["qkv"]        # [d, 3d], [3d]   (weights stored as [in, out])
    wp, bp = params["proj"]           # [d, d],  [d]
    w1, b1 = params["fc1"]            # [d, 4d], [4d]
    w2, b2 = params["fc2"]            # [4d, d], [d]

    # Fold LayerNorm affine into the following linear (fp32, trace time), then cast the
    # weights to bf16 once for the MXU. Biases stay fp32 for the epilogue.
    wqkv_f = (g1[:, None] * wqkv).astype(jnp.bfloat16)
    bqkv_f = (be1 @ wqkv + bqkv).reshape(1, 3 * d)
    w1_f = (g2[:, None] * w1).astype(jnp.bfloat16)
    b1_f = (be2 @ w1 + b1).reshape(1, 4 * d)
    wp_b = wp.astype(jnp.bfloat16)
    w2_b = w2.astype(jnp.bfloat16)
    bp_2 = bp.reshape(1, d)
    b2_2 = b2.reshape(1, d)

    def full(shape):  # full-array block, replicated across the batch grid
        return pl.BlockSpec(shape, lambda b: (0,) * len(shape))

    return pl.pallas_call(
        functools.partial(_block_kernel, heads=heads),
        out_shape=jax.ShapeDtypeStruct((B, T, d), jnp.float32),
        grid=(B,),
        in_specs=[
            pl.BlockSpec((1, T, d), lambda b: (b, 0, 0)),   # x
            full((d, 3 * d)), full((1, 3 * d)),             # Wqkv (LN1 folded), bqkv
            full((d, d)), full((1, d)),                     # Wproj, bproj
            full((d, 4 * d)), full((1, 4 * d)),             # W1 (LN2 folded), b1
            full((4 * d, d)), full((1, d)),                 # W2, b2
        ],
        out_specs=pl.BlockSpec((1, T, d), lambda b: (b, 0, 0)),
        compiler_params=pltpu.CompilerParams(dimension_semantics=("parallel",)),
    )(x, wqkv_f, bqkv_f, wp_b, bp_2, w1_f, b1_f, w2_b, b2_2)


# ------------------------- pure-JAX reference (fp32) -------------------------

def block_reference(params, x, *, heads):
    B, T, d = x.shape
    kd = d // heads
    g1, be1 = params["ln1"]
    g2, be2 = params["ln2"]
    wqkv, bqkv = params["qkv"]
    wp, bp = params["proj"]
    w1, b1 = params["fc1"]
    w2, b2 = params["fc2"]

    def ln(v, g, b):
        mu = v.mean(-1, keepdims=True)
        var = ((v - mu) ** 2).mean(-1, keepdims=True)
        return (v - mu) / jnp.sqrt(var + EPS) * g + b

    y = ln(x, g1, be1)
    qkv = (y @ wqkv + bqkv).reshape(B, T, 3, heads, kd).transpose(2, 0, 3, 1, 4)
    q, k, v = qkv[0], qkv[1], qkv[2]                         # [B, h, T, kd]
    a = jax.nn.softmax(jnp.einsum("bhqe,bhse->bhqs", q, k) / math.sqrt(kd), axis=-1)
    o = jnp.einsum("bhqs,bhse->bhqe", a, v).transpose(0, 2, 1, 3).reshape(B, T, d)
    inner = x + o @ wp + bp
    h = jax.nn.gelu(ln(inner, g2, be2) @ w1 + b1, approximate=False)
    return x + h @ w2 + b2


# --------------------------------- params -----------------------------------

def init_params(key, d, heads):
    assert d % heads == 0
    kq, kp, k1, k2, kg1, kb1, kg2, kb2 = jax.random.split(key, 8)

    def linear(k, fan_in, fan_out):
        # PyTorch nn.Linear default init; stored pre-transposed as [in, out].
        kw, kb = jax.random.split(k)
        bound = 1.0 / math.sqrt(fan_in)
        w = jax.random.uniform(kw, (fan_in, fan_out), jnp.float32, -bound, bound)
        b = jax.random.uniform(kb, (fan_out,), jnp.float32, -bound, bound)
        return w, b

    return {
        "qkv": linear(kq, d, 3 * d),
        "proj": linear(kp, d, d),
        "fc1": linear(k1, d, 4 * d),
        "fc2": linear(k2, 4 * d, d),
        # nn.LayerNorm defaults are (1, 0); perturb slightly so the fold-affine-into-W
        # path is numerically exercised by the self-check below.
        "ln1": (1.0 + 0.05 * jax.random.normal(kg1, (d,), jnp.float32),
                0.05 * jax.random.normal(kb1, (d,), jnp.float32)),
        "ln2": (1.0 + 0.05 * jax.random.normal(kg2, (d,), jnp.float32),
                0.05 * jax.random.normal(kb2, (d,), jnp.float32)),
    }


if __name__ == "__main__":
    D, HEADS = 32, 4
    B, T = 2, 8

    key = jax.random.PRNGKey(0)
    pkey, xkey = jax.random.split(key)
    params = init_params(pkey, D, HEADS)
    x = jax.random.normal(xkey, (B, T, D), dtype=jnp.float32)

    fwd = jax.jit(functools.partial(block_forward, heads=HEADS))
    out = fwd(params, x)
    jax.block_until_ready(out)

    ref = block_reference(params, x, heads=HEADS)
    assert out.shape == (B, T, D), out.shape
    assert bool(jnp.all(jnp.isfinite(out)))
    # bf16 MXU inputs with fp32 accumulation -> small, bounded drift vs fp32 reference.
    assert jnp.allclose(out, ref, atol=5e-2, rtol=5e-2), float(jnp.max(jnp.abs(out - ref)))
    print("KERNEL_OK")
</pallas_src>

<mosaic_0001>
module attributes {stable_mosaic.version = 11 : i64} {
  func.func @_block_kernel(%arg0: i32, %arg1: memref<1x8x32xf32, #tpu.memory_space<vmem>>, %arg2: memref<32x96xbf16, #tpu.memory_space<vmem>>, %arg3: memref<1x96xf32, #tpu.memory_space<vmem>>, %arg4: memref<32x32xbf16, #tpu.memory_space<vmem>>, %arg5: memref<1x32xf32, #tpu.memory_space<vmem>>, %arg6: memref<32x128xbf16, #tpu.memory_space<vmem>>, %arg7: memref<1x128xf32, #tpu.memory_space<vmem>>, %arg8: memref<128x32xbf16, #tpu.memory_space<vmem>>, %arg9: memref<1x32xf32, #tpu.memory_space<vmem>>, %arg10: memref<1x8x32xf32, #tpu.memory_space<vmem>>) attributes {dimension_semantics = [#tpu.dimension_semantics<parallel>], iteration_bounds = array<i64: 2>, scalar_prefetch = 0 : i64, scratch_operands = 0 : i64, tpu.core_type = #tpu.core_type<tc>, window_params = [{transform_indices = @transform_0, window_bounds = array<i64: 1, 8, 32>}, {pipeline_mode = #tpu.pipeline_mode<synchronous>, transform_indices = @transform_1, window_bounds = array<i64: 32, 96>}, {pipeline_mode = #tpu.pipeline_mode<synchronous>, transform_indices = @transform_2, window_bounds = array<i64: 1, 96>}, {pipeline_mode = #tpu.pipeline_mode<synchronous>, transform_indices = @transform_3, window_bounds = array<i64: 32, 32>}, {pipeline_mode = #tpu.pipeline_mode<synchronous>, transform_indices = @transform_4, window_bounds = array<i64: 1, 32>}, {pipeline_mode = #tpu.pipeline_mode<synchronous>, transform_indices = @transform_5, window_bounds = array<i64: 32, 128>}, {pipeline_mode = #tpu.pipeline_mode<synchronous>, transform_indices = @transform_6, window_bounds = array<i64: 1, 128>}, {pipeline_mode = #tpu.pipeline_mode<synchronous>, transform_indices = @transform_7, window_bounds = array<i64: 128, 32>}, {pipeline_mode = #tpu.pipeline_mode<synchronous>, transform_indices = @transform_8, window_bounds = array<i64: 1, 32>}, {transform_indices = @transform_9, window_bounds = array<i64: 1, 8, 32>}]} {
    %c0 = arith.constant 0 : index
    %c0_0 = arith.constant 0 : index
    %c0_1 = arith.constant 0 : index
    %0 = vector.load %arg1[%c0, %c0_0, %c0_1] : memref<1x8x32xf32, #tpu.memory_space<vmem>>, vector<1x8x32xf32>
    %1 = vector.shape_cast %0 : vector<1x8x32xf32> to vector<8x32xf32>
    %cst = arith.constant dense<0.000000e+00> : vector<8xf32>
    %2 = vector.multi_reduction <add>, %1, %cst [1] : vector<8x32xf32> to vector<8xf32>
    %3 = vector.shape_cast %2 : vector<8xf32> to vector<8x1xf32>
    %cst_2 = arith.constant 3.200000e+01 : f32
    %4 = vector.broadcast %cst_2 : f32 to vector<8x1xf32>
    %5 = arith.divf %3, %4 : vector<8x1xf32>
    %6 = vector.broadcast %5 : vector<8x1xf32> to vector<8x32xf32>
    %7 = arith.subf %1, %6 : vector<8x32xf32>
    %8 = arith.mulf %7, %7 : vector<8x32xf32>
    %cst_3 = arith.constant dense<0.000000e+00> : vector<8xf32>
    %9 = vector.multi_reduction <add>, %8, %cst_3 [1] : vector<8x32xf32> to vector<8xf32>
    %10 = vector.shape_cast %9 : vector<8xf32> to vector<8x1xf32>
    %cst_4 = arith.constant 3.200000e+01 : f32
    %11 = vector.broadcast %cst_4 : f32 to vector<8x1xf32>
    %12 = arith.divf %10, %11 : vector<8x1xf32>
    %cst_5 = arith.constant 9.99999974E-6 : f32
    %13 = vector.broadcast %cst_5 : f32 to vector<8x1xf32>
    %14 = arith.addf %12, %13 : vector<8x1xf32>
    %15 = math.rsqrt %14 : vector<8x1xf32>
    %16 = vector.broadcast %15 : vector<8x1xf32> to vector<8x32xf32>
    %17 = arith.mulf %7, %16 : vector<8x32xf32>
    %18 = arith.truncf %17 : vector<8x32xf32> to vector<8x32xbf16>
    %c0_6 = arith.constant 0 : index
    %c0_7 = arith.constant 0 : index
    %19 = vector.load %arg2[%c0_6, %c0_7] : memref<32x96xbf16, #tpu.memory_space<vmem>>, vector<32x96xbf16>
    %cst_8 = arith.constant dense<0.000000e+00> : vector<8x96xf32>
    %20 = tpu.matmul %18, %19, %cst_8 {dimension_numbers = #tpu.dot_dimension_numbers<[1], [0], [0], [1], [0, 0, 1, 1], [], []>} : vector<8x32xbf16>, vector<32x96xbf16>, vector<8x96xf32> -> vector<8x96xf32>
    %c0_9 = arith.constant 0 : index
    %c0_10 = arith.constant 0 : index
    %21 = vector.load %arg3[%c0_9, %c0_10] : memref<1x96xf32, #tpu.memory_space<vmem>>, vector<1x96xf32>
    %22 = vector.broadcast %21 : vector<1x96xf32> to vector<8x96xf32>
    %23 = arith.addf %20, %22 : vector<8x96xf32>
    %c0_11 = arith.constant 0 : index
    %c0_12 = arith.constant 0 : index
    %24 = vector.load %arg4[%c0_11, %c0_12] : memref<32x32xbf16, #tpu.memory_space<vmem>>, vector<32x32xbf16>
    %c0_13 = arith.constant 0 : index
    %c0_14 = arith.constant 0 : index
    %25 = vector.load %arg5[%c0_13, %c0_14] : memref<1x32xf32, #tpu.memory_space<vmem>>, vector<1x32xf32>
    %26 = vector.broadcast %25 : vector<1x32xf32> to vector<8x32xf32>
    %27 = arith.addf %1, %26 : vector<8x32xf32>
    %28 = vector.extract_strided_slice %23 {offsets = [0, 0], sizes = [8, 8], strides = [1, 1]} : vector<8x96xf32> to vector<8x8xf32>
    %cst_15 = arith.constant 0.353553385 : f32
    %29 = vector.broadcast %cst_15 : f32 to vector<8x8xf32>
    %30 = arith.mulf %28, %29 : vector<8x8xf32>
    %31 = arith.truncf %30 : vector<8x8xf32> to vector<8x8xbf16>
    %32 = vector.extract_strided_slice %23 {offsets = [0, 32], sizes = [8, 8], strides = [1, 1]} : vector<8x96xf32> to vector<8x8xf32>
    %33 = arith.truncf %32 : vector<8x8xf32> to vector<8x8xbf16>
    %34 = vector.extract_strided_slice %23 {offsets = [0, 64], sizes = [8, 8], strides = [1, 1]} : vector<8x96xf32> to vector<8x8xf32>
    %35 = arith.truncf %34 : vector<8x8xf32> to vector<8x8xbf16>
    %cst_16 = arith.constant dense<0.000000e+00> : vector<8x8xf32>
    %36 = tpu.matmul %31, %33, %cst_16 {dimension_numbers = #tpu.dot_dimension_numbers<[1], [1], [0], [0], [0, 0, 1, 0], [], []>} : vector<8x8xbf16>, vector<8x8xbf16>, vector<8x8xf32> -> vector<8x8xf32>
    %cst_17 = arith.constant dense<0xFF800000> : vector<8xf32>
    %37 = vector.multi_reduction <maximumf>, %36, %cst_17 [1] : vector<8x8xf32> to vector<8xf32>
    %38 = vector.shape_cast %37 : vector<8xf32> to vector<8x1xf32>
    %39 = vector.broadcast %38 : vector<8x1xf32> to vector<8x8xf32>
    %40 = arith.subf %36, %39 : vector<8x8xf32>
    %41 = math.exp %40 : vector<8x8xf32>
    %cst_18 = arith.constant dense<0.000000e+00> : vector<8xf32>
    %42 = vector.multi_reduction <add>, %41, %cst_18 [1] : vector<8x8xf32> to vector<8xf32>
    %43 = vector.shape_cast %42 : vector<8xf32> to vector<8x1xf32>
    %44 = tpu.reciprocal %43 {approx = true} : vector<8x1xf32> -> vector<8x1xf32>
    %45 = vector.broadcast %44 : vector<8x1xf32> to vector<8x8xf32>
    %46 = arith.mulf %41, %45 : vector<8x8xf32>
    %47 = arith.truncf %46 : vector<8x8xf32> to vector<8x8xbf16>
    %cst_19 = arith.constant dense<0.000000e+00> : vector<8x8xf32>
    %48 = tpu.matmul %47, %35, %cst_19 {dimension_numbers = #tpu.dot_dimension_numbers<[1], [0], [0], [1], [0, 0, 1, 1], [], []>} : vector<8x8xbf16>, vector<8x8xbf16>, vector<8x8xf32> -> vector<8x8xf32>
    %49 = arith.truncf %48 : vector<8x8xf32> to vector<8x8xbf16>
    %50 = vector.extract_strided_slice %24 {offsets = [0, 0], sizes = [8, 32], strides = [1, 1]} : vector<32x32xbf16> to vector<8x32xbf16>
    %cst_20 = arith.constant dense<0.000000e+00> : vector<8x32xf32>
    %51 = tpu.matmul %49, %50, %cst_20 {dimension_numbers = #tpu.dot_dimension_numbers<[1], [0], [0], [1], [0, 0, 1, 1], [], []>} : vector<8x8xbf16>, vector<8x32xbf16>, vector<8x32xf32> -> vector<8x32xf32>
    %52 = arith.addf %27, %51 : vector<8x32xf32>
    %53 = vector.extract_strided_slice %23 {offsets = [0, 8], sizes = [8, 8], strides = [1, 1]} : vector<8x96xf32> to vector<8x8xf32>
    %cst_21 = arith.constant 0.353553385 : f32
    %54 = vector.broadcast %cst_21 : f32 to vector<8x8xf32>
    %55 = arith.mulf %53, %54 : vector<8x8xf32>
    %56 = arith.truncf %55 : vector<8x8xf32> to vector<8x8xbf16>
    %57 = vector.extract_strided_slice %23 {offsets = [0, 40], sizes = [8, 8], strides = [1, 1]} : vector<8x96xf32> to vector<8x8xf32>
    %58 = arith.truncf %57 : vector<8x8xf32> to vector<8x8xbf16>
    %59 = vector.extract_strided_slice %23 {offsets = [0, 72], sizes = [8, 8], strides = [1, 1]} : vector<8x96xf32> to vector<8x8xf32>
    %60 = arith.truncf %59 : vector<8x8xf32> to vector<8x8xbf16>
    %cst_22 = arith.constant dense<0.000000e+00> : vector<8x8xf32>
    %61 = tpu.matmul %56, %58, %cst_22 {dimension_numbers = #tpu.dot_dimension_numbers<[1], [1], [0], [0], [0, 0, 1, 0], [], []>} : vector<8x8xbf16>, vector<8x8xbf16>, vector<8x8xf32> -> vector<8x8xf32>
    %cst_23 = arith.constant dense<0xFF800000> : vector<8xf32>
    %62 = vector.multi_reduction <maximumf>, %61, %cst_23 [1] : vector<8x8xf32> to vector<8xf32>
    %63 = vector.shape_cast %62 : vector<8xf32> to vector<8x1xf32>
    %64 = vector.broadcast %63 : vector<8x1xf32> to vector<8x8xf32>
    %65 = arith.subf %61, %64 : vector<8x8xf32>
    %66 = math.exp %65 : vector<8x8xf32>
    %cst_24 = arith.constant dense<0.000000e+00> : vector<8xf32>
    %67 = vector.multi_reduction <add>, %66, %cst_24 [1] : vector<8x8xf32> to vector<8xf32>
    %68 = vector.shape_cast %67 : vector<8xf32> to vector<8x1xf32>
    %69 = tpu.reciprocal %68 {approx = true} : vector<8x1xf32> -> vector<8x1xf32>
    %70 = vector.broadcast %69 : vector<8x1xf32> to vector<8x8xf32>
    %71 = arith.mulf %66, %70 : vector<8x8xf32>
    %72 = arith.truncf %71 : vector<8x8xf32> to vector<8x8xbf16>
    %cst_25 = arith.constant dense<0.000000e+00> : vector<8x8xf32>
    %73 = tpu.matmul %72, %60, %cst_25 {dimension_numbers = #tpu.dot_dimension_numbers<[1], [0], [0], [1], [0, 0, 1, 1], [], []>} : vector<8x8xbf16>, vector<8x8xbf16>, vector<8x8xf32> -> vector<8x8xf32>
    %74 = arith.truncf %73 : vector<8x8xf32> to vector<8x8xbf16>
    %75 = vector.extract_strided_slice %24 {offsets = [8, 0], sizes = [8, 32], strides = [1, 1]} : vector<32x32xbf16> to vector<8x32xbf16>
    %cst_26 = arith.constant dense<0.000000e+00> : vector<8x32xf32>
    %76 = tpu.matmul %74, %75, %cst_26 {dimension_numbers = #tpu.dot_dimension_numbers<[1], [0], [0], [1], [0, 0, 1, 1], [], []>} : vector<8x8xbf16>, vector<8x32xbf16>, vector<8x32xf32> -> vector<8x32xf32>
    %77 = arith.addf %52, %76 : vector<8x32xf32>
    %78 = vector.extract_strided_slice %23 {offsets = [0, 16], sizes = [8, 8], strides = [1, 1]} : vector<8x96xf32> to vector<8x8xf32>
    %cst_27 = arith.constant 0.353553385 : f32
    %79 = vector.broadcast %cst_27 : f32 to vector<8x8xf32>
    %80 = arith.mulf %78, %79 : vector<8x8xf32>
    %81 = arith.truncf %80 : vector<8x8xf32> to vector<8x8xbf16>
    %82 = vector.extract_strided_slice %23 {offsets = [0, 48], sizes = [8, 8], strides = [1, 1]} : vector<8x96xf32> to vector<8x8xf32>
    %83 = arith.truncf %82 : vector<8x8xf32> to vector<8x8xbf16>
    %84 = vector.extract_strided_slice %23 {offsets = [0, 80], sizes = [8, 8], strides = [1, 1]} : vector<8x96xf32> to vector<8x8xf32>
    %85 = arith.truncf %84 : vector<8x8xf32> to vector<8x8xbf16>
    %cst_28 = arith.constant dense<0.000000e+00> : vector<8x8xf32>
    %86 = tpu.matmul %81, %83, %cst_28 {dimension_numbers = #tpu.dot_dimension_numbers<[1], [1], [0], [0], [0, 0, 1, 0], [], []>} : vector<8x8xbf16>, vector<8x8xbf16>, vector<8x8xf32> -> vector<8x8xf32>
    %cst_29 = arith.constant dense<0xFF800000> : vector<8xf32>
    %87 = vector.multi_reduction <maximumf>, %86, %cst_29 [1] : vector<8x8xf32> to vector<8xf32>
    %88 = vector.shape_cast %87 : vector<8xf32> to vector<8x1xf32>
    %89 = vector.broadcast %88 : vector<8x1xf32> to vector<8x8xf32>
    %90 = arith.subf %86, %89 : vector<8x8xf32>
    %91 = math.exp %90 : vector<8x8xf32>
    %cst_30 = arith.constant dense<0.000000e+00> : vector<8xf32>
    %92 = vector.multi_reduction <add>, %91, %cst_30 [1] : vector<8x8xf32> to vector<8xf32>
    %93 = vector.shape_cast %92 : vector<8xf32> to vector<8x1xf32>
    %94 = tpu.reciprocal %93 {approx = true} : vector<8x1xf32> -> vector<8x1xf32>
    %95 = vector.broadcast %94 : vector<8x1xf32> to vector<8x8xf32>
    %96 = arith.mulf %91, %95 : vector<8x8xf32>
    %97 = arith.truncf %96 : vector<8x8xf32> to vector<8x8xbf16>
    %cst_31 = arith.constant dense<0.000000e+00> : vector<8x8xf32>
    %98 = tpu.matmul %97, %85, %cst_31 {dimension_numbers = #tpu.dot_dimension_numbers<[1], [0], [0], [1], [0, 0, 1, 1], [], []>} : vector<8x8xbf16>, vector<8x8xbf16>, vector<8x8xf32> -> vector<8x8xf32>
    %99 = arith.truncf %98 : vector<8x8xf32> to vector<8x8xbf16>
    %100 = vector.extract_strided_slice %24 {offsets = [16, 0], sizes = [8, 32], strides = [1, 1]} : vector<32x32xbf16> to vector<8x32xbf16>
    %cst_32 = arith.constant dense<0.000000e+00> : vector<8x32xf32>
    %101 = tpu.matmul %99, %100, %cst_32 {dimension_numbers = #tpu.dot_dimension_numbers<[1], [0], [0], [1], [0, 0, 1, 1], [], []>} : vector<8x8xbf16>, vector<8x32xbf16>, vector<8x32xf32> -> vector<8x32xf32>
    %102 = arith.addf %77, %101 : vector<8x32xf32>
    %103 = vector.extract_strided_slice %23 {offsets = [0, 24], sizes = [8, 8], strides = [1, 1]} : vector<8x96xf32> to vector<8x8xf32>
    %cst_33 = arith.constant 0.353553385 : f32
    %104 = vector.broadcast %cst_33 : f32 to vector<8x8xf32>
    %105 = arith.mulf %103, %104 : vector<8x8xf32>
    %106 = arith.truncf %105 : vector<8x8xf32> to vector<8x8xbf16>
    %107 = vector.extract_strided_slice %23 {offsets = [0, 56], sizes = [8, 8], strides = [1, 1]} : vector<8x96xf32> to vector<8x8xf32>
    %108 = arith.truncf %107 : vector<8x8xf32> to vector<8x8xbf16>
    %109 = vector.extract_strided_slice %23 {offsets = [0, 88], sizes = [8, 8], strides = [1, 1]} : vector<8x96xf32> to vector<8x8xf32>
    %110 = arith.truncf %109 : vector<8x8xf32> to vector<8x8xbf16>
    %cst_34 = arith.constant dense<0.000000e+00> : vector<8x8xf32>
    %111 = tpu.matmul %106, %108, %cst_34 {dimension_numbers = #tpu.dot_dimension_numbers<[1], [1], [0], [0], [0, 0, 1, 0], [], []>} : vector<8x8xbf16>, vector<8x8xbf16>, vector<8x8xf32> -> vector<8x8xf32>
    %cst_35 = arith.constant dense<0xFF800000> : vector<8xf32>
    %112 = vector.multi_reduction <maximumf>, %111, %cst_35 [1] : vector<8x8xf32> to vector<8xf32>
    %113 = vector.shape_cast %112 : vector<8xf32> to vector<8x1xf32>
    %114 = vector.broadcast %113 : vector<8x1xf32> to vector<8x8xf32>
    %115 = arith.subf %111, %114 : vector<8x8xf32>
    %116 = math.exp %115 : vector<8x8xf32>
    %cst_36 = arith.constant dense<0.000000e+00> : vector<8xf32>
    %117 = vector.multi_reduction <add>, %116, %cst_36 [1] : vector<8x8xf32> to vector<8xf32>
    %118 = vector.shape_cast %117 : vector<8xf32> to vector<8x1xf32>
    %119 = tpu.reciprocal %118 {approx = true} : vector<8x1xf32> -> vector<8x1xf32>
    %120 = vector.broadcast %119 : vector<8x1xf32> to vector<8x8xf32>
    %121 = arith.mulf %116, %120 : vector<8x8xf32>
    %122 = arith.truncf %121 : vector<8x8xf32> to vector<8x8xbf16>
    %cst_37 = arith.constant dense<0.000000e+00> : vector<8x8xf32>
    %123 = tpu.matmul %122, %110, %cst_37 {dimension_numbers = #tpu.dot_dimension_numbers<[1], [0], [0], [1], [0, 0, 1, 1], [], []>} : vector<8x8xbf16>, vector<8x8xbf16>, vector<8x8xf32> -> vector<8x8xf32>
    %124 = arith.truncf %123 : vector<8x8xf32> to vector<8x8xbf16>
    %125 = vector.extract_strided_slice %24 {offsets = [24, 0], sizes = [8, 32], strides = [1, 1]} : vector<32x32xbf16> to vector<8x32xbf16>
    %cst_38 = arith.constant dense<0.000000e+00> : vector<8x32xf32>
    %126 = tpu.matmul %124, %125, %cst_38 {dimension_numbers = #tpu.dot_dimension_numbers<[1], [0], [0], [1], [0, 0, 1, 1], [], []>} : vector<8x8xbf16>, vector<8x32xbf16>, vector<8x32xf32> -> vector<8x32xf32>
    %127 = arith.addf %102, %126 : vector<8x32xf32>
    %cst_39 = arith.constant dense<0.000000e+00> : vector<8xf32>
    %128 = vector.multi_reduction <add>, %127, %cst_39 [1] : vector<8x32xf32> to vector<8xf32>
    %129 = vector.shape_cast %128 : vector<8xf32> to vector<8x1xf32>
    %cst_40 = arith.constant 3.200000e+01 : f32
    %130 = vector.broadcast %cst_40 : f32 to vector<8x1xf32>
    %131 = arith.divf %129, %130 : vector<8x1xf32>
    %132 = vector.broadcast %131 : vector<8x1xf32> to vector<8x32xf32>
    %133 = arith.subf %127, %132 : vector<8x32xf32>
    %134 = arith.mulf %133, %133 : vector<8x32xf32>
    %cst_41 = arith.constant dense<0.000000e+00> : vector<8xf32>
    %135 = vector.multi_reduction <add>, %134, %cst_41 [1] : vector<8x32xf32> to vector<8xf32>
    %136 = vector.shape_cast %135 : vector<8xf32> to vector<8x1xf32>
    %cst_42 = arith.constant 3.200000e+01 : f32
    %137 = vector.broadcast %cst_42 : f32 to vector<8x1xf32>
    %138 = arith.divf %136, %137 : vector<8x1xf32>
    %cst_43 = arith.constant 9.99999974E-6 : f32
    %139 = vector.broadcast %cst_43 : f32 to vector<8x1xf32>
    %140 = arith.addf %138, %139 : vector<8x1xf32>
    %141 = math.rsqrt %140 : vector<8x1xf32>
    %142 = vector.broadcast %141 : vector<8x1xf32> to vector<8x32xf32>
    %143 = arith.mulf %133, %142 : vector<8x32xf32>
    %144 = arith.truncf %143 : vector<8x32xf32> to vector<8x32xbf16>
    %c0_44 = arith.constant 0 : index
    %c0_45 = arith.constant 0 : index
    %145 = vector.load %arg6[%c0_44, %c0_45] : memref<32x128xbf16, #tpu.memory_space<vmem>>, vector<32x128xbf16>
    %cst_46 = arith.constant dense<0.000000e+00> : vector<8x128xf32>
    %146 = tpu.matmul %144, %145, %cst_46 {dimension_numbers = #tpu.dot_dimension_numbers<[1], [0], [0], [1], [0, 0, 1, 1], [], []>} : vector<8x32xbf16>, vector<32x128xbf16>, vector<8x128xf32> -> vector<8x128xf32>
    %c0_47 = arith.constant 0 : index
    %c0_48 = arith.constant 0 : index
    %147 = vector.load %arg7[%c0_47, %c0_48] : memref<1x128xf32, #tpu.memory_space<vmem>>, vector<1x128xf32>
    %148 = vector.broadcast %147 : vector<1x128xf32> to vector<8x128xf32>
    %149 = arith.addf %146, %148 : vector<8x128xf32>
    %cst_49 = arith.constant 5.000000e-01 : f32
    %150 = vector.broadcast %cst_49 : f32 to vector<8x128xf32>
    %151 = arith.mulf %150, %149 : vector<8x128xf32>
    %cst_50 = arith.constant 0.707106769 : f32
    %152 = vector.broadcast %cst_50 : f32 to vector<8x128xf32>
    %153 = arith.mulf %149, %152 : vector<8x128xf32>
    %cst_51 = arith.constant 0.000000e+00 : f32
    %154 = vector.broadcast %cst_51 : f32 to vector<8x128xf32>
    %155 = arith.cmpf olt, %153, %154 : vector<8x128xf32>
    %cst_52 = arith.constant -1.000000e+00 : f32
    %cst_53 = arith.constant 1.000000e+00 : f32
    %156 = vector.broadcast %cst_52 : f32 to vector<8x128xf32>
    %157 = vector.broadcast %cst_53 : f32 to vector<8x128xf32>
    %158 = arith.select %155, %156, %157 : vector<8x128xi1>, vector<8x128xf32>
    %159 = math.absf %153 : vector<8x128xf32>
    %cst_54 = arith.constant 0.327591091 : f32
    %160 = vector.broadcast %cst_54 : f32 to vector<8x128xf32>
    %161 = arith.mulf %160, %159 : vector<8x128xf32>
    %cst_55 = arith.constant 1.000000e+00 : f32
    %162 = vector.broadcast %cst_55 : f32 to vector<8x128xf32>
    %163 = arith.addf %162, %161 : vector<8x128xf32>
    %cst_56 = arith.constant 1.000000e+00 : f32
    %164 = vector.broadcast %cst_56 : f32 to vector<8x128xf32>
    %165 = arith.divf %164, %163 : vector<8x128xf32>
    %cst_57 = arith.constant 1.06140542 : f32
    %166 = vector.broadcast %cst_57 : f32 to vector<8x128xf32>
    %167 = arith.mulf %166, %165 : vector<8x128xf32>
    %cst_58 = arith.constant -1.45315206 : f32
    %168 = vector.broadcast %cst_58 : f32 to vector<8x128xf32>
    %169 = arith.addf %167, %168 : vector<8x128xf32>
    %170 = arith.mulf %169, %165 : vector<8x128xf32>
    %cst_59 = arith.constant 1.42141378 : f32
    %171 = vector.broadcast %cst_59 : f32 to vector<8x128xf32>
    %172 = arith.addf %170, %171 : vector<8x128xf32>
    %173 = arith.mulf %172, %165 : vector<8x128xf32>
    %cst_60 = arith.constant -0.284496725 : f32
    %174 = vector.broadcast %cst_60 : f32 to vector<8x128xf32>
    %175 = arith.addf %173, %174 : vector<8x128xf32>
    %176 = arith.mulf %175, %165 : vector<8x128xf32>
    %cst_61 = arith.constant 0.254829586 : f32
    %177 = vector.broadcast %cst_61 : f32 to vector<8x128xf32>
    %178 = arith.addf %176, %177 : vector<8x128xf32>
    %179 = arith.mulf %178, %165 : vector<8x128xf32>
    %cst_62 = arith.constant 0.000000e+00 : f32
    %180 = vector.broadcast %cst_62 : f32 to vector<8x128xf32>
    %181 = arith.subf %180, %159 : vector<8x128xf32>
    %182 = arith.mulf %181, %159 : vector<8x128xf32>
    %183 = math.exp %182 : vector<8x128xf32>
    %184 = arith.mulf %179, %183 : vector<8x128xf32>
    %cst_63 = arith.constant 1.000000e+00 : f32
    %185 = vector.broadcast %cst_63 : f32 to vector<8x128xf32>
    %186 = arith.subf %185, %184 : vector<8x128xf32>
    %187 = arith.mulf %158, %186 : vector<8x128xf32>
    %cst_64 = arith.constant 1.000000e+00 : f32
    %188 = vector.broadcast %cst_64 : f32 to vector<8x128xf32>
    %189 = arith.addf %188, %187 : vector<8x128xf32>
    %190 = arith.mulf %151, %189 : vector<8x128xf32>
    %191 = arith.truncf %190 : vector<8x128xf32> to vector<8x128xbf16>
    %c0_65 = arith.constant 0 : index
    %c0_66 = arith.constant 0 : index
    %192 = vector.load %arg8[%c0_65, %c0_66] : memref<128x32xbf16, #tpu.memory_space<vmem>>, vector<128x32xbf16>
    %cst_67 = arith.constant dense<0.000000e+00> : vector<8x32xf32>
    %193 = tpu.matmul %191, %192, %cst_67 {dimension_numbers = #tpu.dot_dimension_numbers<[1], [0], [0], [1], [0, 0, 1, 1], [], []>} : vector<8x128xbf16>, vector<128x32xbf16>, vector<8x32xf32> -> vector<8x32xf32>
    %194 = arith.addf %1, %193 : vector<8x32xf32>
    %c0_68 = arith.constant 0 : index
    %c0_69 = arith.constant 0 : index
    %195 = vector.load %arg9[%c0_68, %c0_69] : memref<1x32xf32, #tpu.memory_space<vmem>>, vector<1x32xf32>
    %196 = vector.broadcast %195 : vector<1x32xf32> to vector<8x32xf32>
    %197 = arith.addf %194, %196 : vector<8x32xf32>
    %c0_70 = arith.constant 0 : index
    %c0_71 = arith.constant 0 : index
    %c0_72 = arith.constant 0 : index
    %198 = vector.load %arg10[%c0_70, %c0_71, %c0_72] : memref<1x8x32xf32, #tpu.memory_space<vmem>>, vector<1x8x32xf32>
    %199 = vector.shape_cast %198 : vector<1x8x32xf32> to vector<8x32xf32>
    %200 = vector.shape_cast %197 : vector<8x32xf32> to vector<1x8x32xf32>
    tpu.vector_store %arg10[%c0_70, %c0_71, %c0_72], %200 {strides = array<i32>} : memref<1x8x32xf32, #tpu.memory_space<vmem>>, vector<1x8x32xf32>,
    return
  }
  func.func @transform_0(%arg0: i32) -> (i32, i32, i32) {
    %c0_i32 = arith.constant 0 : i32
    %c0_i32_0 = arith.constant 0 : i32
    %c0_i32_1 = arith.constant 0 : i32
    return %arg0, %c0_i32, %c0_i32_0 : i32, i32, i32
  }
  func.func @transform_1(%arg0: i32) -> (i32, i32) {
    %c0_i32 = arith.constant 0 : i32
    %c0_i32_0 = arith.constant 0 : i32
    %c0_i32_1 = arith.constant 0 : i32
    return %c0_i32, %c0_i32_0 : i32, i32
  }
  func.func @transform_2(%arg0: i32) -> (i32, i32) {
    %c0_i32 = arith.constant 0 : i32
    %c0_i32_0 = arith.constant 0 : i32
    %c0_i32_1 = arith.constant 0 : i32
    return %c0_i32, %c0_i32_0 : i32, i32
  }
  func.func @transform_3(%arg0: i32) -> (i32, i32) {
    %c0_i32 = arith.constant 0 : i32
    %c0_i32_0 = arith.constant 0 : i32
    %c0_i32_1 = arith.constant 0 : i32
    return %c0_i32, %c0_i32_0 : i32, i32
  }
  func.func @transform_4(%arg0: i32) -> (i32, i32) {
    %c0_i32 = arith.constant 0 : i32
    %c0_i32_0 = arith.constant 0 : i32
    %c0_i32_1 = arith.constant 0 : i32
    return %c0_i32, %c0_i32_0 : i32, i32
  }
  func.func @transform_5(%arg0: i32) -> (i32, i32) {
    %c0_i32 = arith.constant 0 : i32
    %c0_i32_0 = arith.constant 0 : i32
    %c0_i32_1 = arith.constant 0 : i32
    return %c0_i32, %c0_i32_0 : i32, i32
  }
  func.func @transform_6(%arg0: i32) -> (i32, i32) {
    %c0_i32 = arith.constant 0 : i32
    %c0_i32_0 = arith.constant 0 : i32
    %c0_i32_1 = arith.constant 0 : i32
    return %c0_i32, %c0_i32_0 : i32, i32
  }
  func.func @transform_7(%arg0: i32) -> (i32, i32) {
    %c0_i32 = arith.constant 0 : i32
    %c0_i32_0 = arith.constant 0 : i32
    %c0_i32_1 = arith.constant 0 : i32
    return %c0_i32, %c0_i32_0 : i32, i32
  }
  func.func @transform_8(%arg0: i32) -> (i32, i32) {
    %c0_i32 = arith.constant 0 : i32
    %c0_i32_0 = arith.constant 0 : i32
    %c0_i32_1 = arith.constant 0 : i32
    return %c0_i32, %c0_i32_0 : i32, i32
  }
  func.func @transform_9(%arg0: i32) -> (i32, i32, i32) {
    %c0_i32 = arith.constant 0 : i32
    %c0_i32_0 = arith.constant 0 : i32
    %c0_i32_1 = arith.constant 0 : i32
    return %arg0, %c0_i32, %c0_i32_0 : i32, i32, i32
  }
}

</mosaic_0001>

<llo_original>
// kernel: block_forward.1
$region0: #{block_forward.1}
  #allocation0 [shape = 'u32[]', space=smem, size = 0x4, offset = 0x4, fixed_abs, tag = 'smem constant byte address 0x4 - core index']
  #allocation1 [shape = 'u32[72,128]{1,0:T(1,128)}', space=vmem, size = 0x9000, scoped, tag = 'internal scratch']
  %s0 = inlined_call_operand.vmem [shape: f32[2,8,32], index: 0, kind: input, shape index: {}]
  %s1 = inlined_call_operand.vmem [shape: bf16[32,96], index: 1, kind: input, shape index: {}]
  %s2 = inlined_call_operand.vmem [shape: f32[1,96], index: 2, kind: input, shape index: {}]
  %s3 = inlined_call_operand.vmem [shape: bf16[32,32], index: 3, kind: input, shape index: {}]
  %s4 = inlined_call_operand.vmem [shape: f32[1,32], index: 4, kind: input, shape index: {}]
  %s5 = inlined_call_operand.vmem [shape: bf16[32,128], index: 5, kind: input, shape index: {}]
  %s6 = inlined_call_operand.vmem [shape: f32[1,128], index: 6, kind: input, shape index: {}]
  %s7 = inlined_call_operand.vmem [shape: bf16[128,32], index: 7, kind: input, shape index: {}]
  %s8 = inlined_call_operand.vmem [shape: f32[1,32], index: 8, kind: input, shape index: {}]
  %s9 = inlined_call_operand.hbm [shape: f32[2,8,32], index: 9, kind: output, shape index: {}]
  %s10 = sld [smem:[#allocation0]]
  $region69: #{block_forward.1} parent=0
    _
  %s12 = ssub.s32 1, %s10
  %s13 = scalar_select 0, %s12, %s10
  $region1: #{block_forward.1} parent=0
    #allocation2 [shape = 'u8[8192]{0}', space=vmem, size = 0x2000, scoped, tag = 'output window, operand 0']
    #allocation3 [shape = 's32[2]{0}', space=sflag, size = 0x8, scoped, tag = 'scoped memory for block_forward.1']
    %14 = vsyncpa [#allocation3], 0
    %s15 = scalar_lea.sflag [#allocation3], 1
    %16 = vsyncpa %s15, 0
    loop: start=0, step=1, limit=4
    $region2: #{block_forward.1} parent=1 // loop_pre_header
      _
    $region3: #{block_forward.1} parent=1 // loop_header
      %s18 = sphi 0, %s22
      %p19 = scmp.ge.s32.totalorder %s18, 4
      %s28 = sphi 0, %s30
      %s31 = sphi 0, %s28
      %s32 = sphi 0, %s31
      %s48 = sphi 0, %s32
      %s52 = sphi 0, %s52
      %s54 = sphi 0, %s52
      %s55 = sphi 0, %s54
      %s69 = sphi 0, %s55
      %s73 = sphi 0, %s73
      %s75 = sphi 0, %s73
      %s76 = sphi 0, %s75
      %s90 = sphi 0, %s76
      %s94 = sphi 0, %s94
      %s96 = sphi 0, %s94
      %s97 = sphi 0, %s96
      %s111 = sphi 0, %s97
      %s115 = sphi 0, %s115
      %s117 = sphi 0, %s115
      %s118 = sphi 0, %s117
      %s132 = sphi 0, %s118
      %s136 = sphi 0, %s136
      %s138 = sphi 0, %s136
      %s139 = sphi 0, %s138
      %s153 = sphi 0, %s139
      %s157 = sphi 0, %s157
      %s159 = sphi 0, %s157
      %s160 = sphi 0, %s159
      %s174 = sphi 0, %s160
      %s178 = sphi 0, %s178
      %s180 = sphi 0, %s178
      %s181 = sphi 0, %s180
      %s195 = sphi 0, %s181
      %s199 = sphi 0, %s199
      %s201 = sphi 0, %s199
      %s202 = sphi 0, %s201
      %s216 = sphi 0, %s202
      %s222 = sphi 0, %s224
      %s225 = sphi 0, %s222
      %s226 = sphi 0, %s225
      %s242 = sphi 0, %s226
    $region4: #{block_forward.1} parent=1 // loop_header_branch
      %21 = sbr.rel (%p19) target = $region8
    $region5: #{block_forward.1} parent=1 // loop_body
      %s23 = ssub.s32 %s18, 1
      %s24 = ssub.s32 %s18, 2
      %s25 = sadd.s32 %s18, 1
      %s26 = ssub.s32 %s18, %s25
      %p27 = scmp.eq.s32.totalorder %s26, 0
      %s29 = sadd.s32 %s28, 1
      %s30 = scalar_select %p27, %s28, %s29
      %p33 = pneg %p27
      %p34 = scmp.eq.s32.totalorder %s18, 1
      %p35 = por %p33, %p34
      %p36 = scmp.ne.s32.totalorder %s28, %s31
      %p37 = scmp.eq.s32.totalorder %s18, 0
      %p38 = por %p36, %p37
      %p39 = scmp.ne.s32.totalorder %s28, %s31
      %p40 = scmp.eq.s32.totalorder %s23, 1
      %p41 = por %p39, %p40
      %p42 = scmp.ne.s32.totalorder %s31, %s32
      %p43 = scmp.eq.s32.totalorder %s23, 0
      %p44 = por %p42, %p43
      %p45 = scmp.ne.s32.totalorder %s31, %s32
      %p46 = scmp.eq.s32.totalorder %s24, 1
      %p47 = por %p45, %p46
      %p49 = scmp.ne.s32.totalorder %s32, %s48
      %p50 = scmp.eq.s32.totalorder %s24, 0
      %p51 = por %p49, %p50
      %s53 = sadd.s32 %s52, 1
      %p56 = scmp.eq.s32.totalorder %s18, 1
      %p57 = scmp.ne.s32.totalorder %s52, %s54
      %p58 = scmp.eq.s32.totalorder %s18, 0
      %p59 = por %p57, %p58
      %p60 = scmp.ne.s32.totalorder %s52, %s54
      %p61 = scmp.eq.s32.totalorder %s23, 1
      %p62 = por %p60, %p61
      %p63 = scmp.ne.s32.totalorder %s54, %s55
      %p64 = scmp.eq.s32.totalorder %s23, 0
      %p65 = por %p63, %p64
      %p66 = scmp.ne.s32.totalorder %s54, %s55
      %p67 = scmp.eq.s32.totalorder %s24, 1
      %p68 = por %p66, %p67
      %p70 = scmp.ne.s32.totalorder %s55, %s69
      %p71 = scmp.eq.s32.totalorder %s24, 0
      %p72 = por %p70, %p71
      %s74 = sadd.s32 %s73, 1
      %p77 = scmp.eq.s32.totalorder %s18, 1
      %p78 = scmp.ne.s32.totalorder %s73, %s75
      %p79 = scmp.eq.s32.totalorder %s18, 0
      %p80 = por %p78, %p79
      %p81 = scmp.ne.s32.totalorder %s73, %s75
      %p82 = scmp.eq.s32.totalorder %s23, 1
      %p83 = por %p81, %p82
      %p84 = scmp.ne.s32.totalorder %s75, %s76
      %p85 = scmp.eq.s32.totalorder %s23, 0
      %p86 = por %p84, %p85
      %p87 = scmp.ne.s32.totalorder %s75, %s76
      %p88 = scmp.eq.s32.totalorder %s24, 1
      %p89 = por %p87, %p88
      %p91 = scmp.ne.s32.totalorder %s76, %s90
      %p92 = scmp.eq.s32.totalorder %s24, 0
      %p93 = por %p91, %p92
      %s95 = sadd.s32 %s94, 1
      %p98 = scmp.eq.s32.totalorder %s18, 1
      %p99 = scmp.ne.s32.totalorder %s94, %s96
      %p100 = scmp.eq.s32.totalorder %s18, 0
      %p101 = por %p99, %p100
      %p102 = scmp.ne.s32.totalorder %s94, %s96
      %p103 = scmp.eq.s32.totalorder %s23, 1
      %p104 = por %p102, %p103
      %p105 = scmp.ne.s32.totalorder %s96, %s97
      %p106 = scmp.eq.s32.totalorder %s23, 0
      %p107 = por %p105, %p106
      %p108 = scmp.ne.s32.totalorder %s96, %s97
      %p109 = scmp.eq.s32.totalorder %s24, 1
      %p110 = por %p108, %p109
      %p112 = scmp.ne.s32.totalorder %s97, %s111
      %p113 = scmp.eq.s32.totalorder %s24, 0
      %p114 = por %p112, %p113
      %s116 = sadd.s32 %s115, 1
      %p119 = scmp.eq.s32.totalorder %s18, 1
      %p120 = scmp.ne.s32.totalorder %s115, %s117
      %p121 = scmp.eq.s32.totalorder %s18, 0
      %p122 = por %p120, %p121
      %p123 = scmp.ne.s32.totalorder %s115, %s117
      %p124 = scmp.eq.s32.totalorder %s23, 1
      %p125 = por %p123, %p124
      %p126 = scmp.ne.s32.totalorder %s117, %s118
      %p127 = scmp.eq.s32.totalorder %s23, 0
      %p128 = por %p126, %p127
      %p129 = scmp.ne.s32.totalorder %s117, %s118
      %p130 = scmp.eq.s32.totalorder %s24, 1
      %p131 = por %p129, %p130
      %p133 = scmp.ne.s32.totalorder %s118, %s132
      %p134 = scmp.eq.s32.totalorder %s24, 0
      %p135 = por %p133, %p134
      %s137 = sadd.s32 %s136, 1
      %p140 = scmp.eq.s32.totalorder %s18, 1
      %p141 = scmp.ne.s32.totalorder %s136, %s138
      %p142 = scmp.eq.s32.totalorder %s18, 0
      %p143 = por %p141, %p142
      %p144 = scmp.ne.s32.totalorder %s136, %s138
      %p145 = scmp.eq.s32.totalorder %s23, 1
      %p146 = por %p144, %p145
      %p147 = scmp.ne.s32.totalorder %s138, %s139
      %p148 = scmp.eq.s32.totalorder %s23, 0
      %p149 = por %p147, %p148
      %p150 = scmp.ne.s32.totalorder %s138, %s139
      %p151 = scmp.eq.s32.totalorder %s24, 1
      %p152 = por %p150, %p151
      %p154 = scmp.ne.s32.totalorder %s139, %s153
      %p155 = scmp.eq.s32.totalorder %s24, 0
      %p156 = por %p154, %p155
      %s158 = sadd.s32 %s157, 1
      %p161 = scmp.eq.s32.totalorder %s18, 1
      %p162 = scmp.ne.s32.totalorder %s157, %s159
      %p163 = scmp.eq.s32.totalorder %s18, 0
      %p164 = por %p162, %p163
      %p165 = scmp.ne.s32.totalorder %s157, %s159
      %p166 = scmp.eq.s32.totalorder %s23, 1
      %p167 = por %p165, %p166
      %p168 = scmp.ne.s32.totalorder %s159, %s160
      %p169 = scmp.eq.s32.totalorder %s23, 0
      %p170 = por %p168, %p169
      %p171 = scmp.ne.s32.totalorder %s159, %s160
      %p172 = scmp.eq.s32.totalorder %s24, 1
      %p173 = por %p171, %p172
      %p175 = scmp.ne.s32.totalorder %s160, %s174
      %p176 = scmp.eq.s32.totalorder %s24, 0
      %p177 = por %p175, %p176
      %s179 = sadd.s32 %s178, 1
      %p182 = scmp.eq.s32.totalorder %s18, 1
      %p183 = scmp.ne.s32.totalorder %s178, %s180
      %p184 = scmp.eq.s32.totalorder %s18, 0
      %p185 = por %p183, %p184
      %p186 = scmp.ne.s32.totalorder %s178, %s180
      %p187 = scmp.eq.s32.totalorder %s23, 1
      %p188 = por %p186, %p187
      %p189 = scmp.ne.s32.totalorder %s180, %s181
      %p190 = scmp.eq.s32.totalorder %s23, 0
      %p191 = por %p189, %p190
      %p192 = scmp.ne.s32.totalorder %s180, %s181
      %p193 = scmp.eq.s32.totalorder %s24, 1
      %p194 = por %p192, %p193
      %p196 = scmp.ne.s32.totalorder %s181, %s195
      %p197 = scmp.eq.s32.totalorder %s24, 0
      %p198 = por %p196, %p197
      %s200 = sadd.s32 %s199, 1
      %p203 = scmp.eq.s32.totalorder %s18, 1
      %p204 = scmp.ne.s32.totalorder %s199, %s201
      %p205 = scmp.eq.s32.totalorder %s18, 0
      %p206 = por %p204, %p205
      %p207 = scmp.ne.s32.totalorder %s199, %s201
      %p208 = scmp.eq.s32.totalorder %s23, 1
      %p209 = por %p207, %p208
      %p210 = scmp.ne.s32.totalorder %s201, %s202
      %p211 = scmp.eq.s32.totalorder %s23, 0
      %p212 = por %p210, %p211
      %p213 = scmp.ne.s32.totalorder %s201, %s202
      %p214 = scmp.eq.s32.totalorder %s24, 1
      %p215 = por %p213, %p214
      %p217 = scmp.ne.s32.totalorder %s202, %s216
      %p218 = scmp.eq.s32.totalorder %s24, 0
      %p219 = por %p217, %p218
      %s220 = ssub.s32 %s18, %s25
      %p221 = scmp.eq.s32.totalorder %s220, 0
      %s223 = sadd.s32 %s222, 1
      %s224 = scalar_select %p221, %s222, %s223
      %p227 = pneg %p221
      %p228 = scmp.eq.s32.totalorder %s18, 1
      %p229 = por %p227, %p228
      %p230 = scmp.ne.s32.totalorder %s222, %s225
      %p231 = scmp.eq.s32.totalorder %s18, 0
      %p232 = por %p230, %p231
      %p233 = scmp.ne.s32.totalorder %s222, %s225
      %p234 = scmp.eq.s32.totalorder %s23, 1
      %p235 = por %p233, %p234
      %p236 = scmp.ne.s32.totalorder %s225, %s226
      %p237 = scmp.eq.s32.totalorder %s23, 0
      %p238 = por %p236, %p237
      %p239 = scmp.ne.s32.totalorder %s225, %s226
      %p240 = scmp.eq.s32.totalorder %s24, 1
      %p241 = por %p239, %p240
      %p243 = scmp.ne.s32.totalorder %s226, %s242
      %p244 = scmp.eq.s32.totalorder %s24, 0
      %p245 = por %p243, %p244
      %p246 = scmp.le.s32.totalorder 1, %s18
      %p247 = scmp.lt.s32.totalorder %s18, 3
      %p248 = pnand %p246, %p247
      %p249 = pneg %p248
      // Predicated region
      $region9: #{block_forward.1} parent=5 // pred_check
        _
      $region10: #{block_forward.1} parent=5 // pred_check_branch
        %251 = sbr.rel (%p248) target = $region12
      $region11: #{block_forward.1} parent=5 // pred_region
        %s252 = ssub.s32 %s18, 1
        // Predicated region
        $region13: #{block_forward.1} parent=11 // pred_check
          %p253 = pneg %p65
        $region14: #{block_forward.1} parent=11 // pred_check_branch
          %255 = sbr.rel (%p253) target = $region16
        $region15: #{block_forward.1} parent=11 // pred_region
          _
        $region16: #{block_forward.1} parent=11 // pred_fallthru
          _
        // Predicated region
        $region17: #{block_forward.1} parent=11 // pred_check
          %p256 = pneg %p86
        $region18: #{block_forward.1} parent=11 // pred_check_branch
          %258 = sbr.rel (%p256) target = $region20
        $region19: #{block_forward.1} parent=11 // pred_region
          _
        $region20: #{block_forward.1} parent=11 // pred_fallthru
          _
        // Predicated region
        $region21: #{block_forward.1} parent=11 // pred_check
          %p259 = pneg %p107
        $region22: #{block_forward.1} parent=11 // pred_check_branch
          %261 = sbr.rel (%p259) target = $region24
        $region23: #{block_forward.1} parent=11 // pred_region
          _
        $region24: #{block_forward.1} parent=11 // pred_fallthru
          _
        // Predicated region
        $region25: #{block_forward.1} parent=11 // pred_check
          %p262 = pneg %p128
        $region26: #{block_forward.1} parent=11 // pred_check_branch
          %264 = sbr.rel (%p262) target = $region28
        $region27: #{block_forward.1} parent=11 // pred_region
          _
        $region28: #{block_forward.1} parent=11 // pred_fallthru
          _
        // Predicated region
        $region29: #{block_forward.1} parent=11 // pred_check
          %p265 = pneg %p149
        $region30: #{block_forward.1} parent=11 // pred_check_branch
          %267 = sbr.rel (%p265) target = $region32
        $region31: #{block_forward.1} parent=11 // pred_region
          _
        $region32: #{block_forward.1} parent=11 // pred_fallthru
          _
        // Predicated region
        $region33: #{block_forward.1} parent=11 // pred_check
          %p268 = pneg %p170
        $region34: #{block_forward.1} parent=11 // pred_check_branch
          %270 = sbr.rel (%p268) target = $region36
        $region35: #{block_forward.1} parent=11 // pred_region
          _
        $region36: #{block_forward.1} parent=11 // pred_fallthru
          _
        // Predicated region
        $region37: #{block_forward.1} parent=11 // pred_check
          %p271 = pneg %p191
        $region38: #{block_forward.1} parent=11 // pred_check_branch
          %273 = sbr.rel (%p271) target = $region40
        $region39: #{block_forward.1} parent=11 // pred_region
          _
        $region40: #{block_forward.1} parent=11 // pred_fallthru
          _
        // Predicated region
        $region41: #{block_forward.1} parent=11 // pred_check
          %p274 = pneg %p212
        $region42: #{block_forward.1} parent=11 // pred_check_branch
          %276 = sbr.rel (%p274) target = $region44
        $region43: #{block_forward.1} parent=11 // pred_region
          _
        $region44: #{block_forward.1} parent=11 // pred_fallthru
          _
      $region12: #{block_forward.1} parent=5 // pred_fallthru
        _
      %p277 = scmp.lt.s32.totalorder %s18, 2
      // Predicated region
      $region45: #{block_forward.1} parent=5 // pred_check
        %p278 = pneg %p277
      $region46: #{block_forward.1} parent=5 // pred_check_branch
        %280 = sbr.rel (%p278) target = $region48
      $region47: #{block_forward.1} parent=5 // pred_region
        // Predicated region
        $region49: #{block_forward.1} parent=47 // pred_check
          %p281 = pneg %p38
        $region50: #{block_forward.1} parent=47 // pred_check_branch
          %283 = sbr.rel (%p281) target = $region52
        $region51: #{block_forward.1} parent=47 // pred_region
          %p284 = scmp.lt.s32.totalorder %s18, 1
          %s285 = scalar_select %p284, %s18, 1
          %s286 = smul.addr %s285, 8
          %s287 = scalar_lea.vmem %s0, %s286
        $region52: #{block_forward.1} parent=47 // pred_fallthru
          _
      $region48: #{block_forward.1} parent=5 // pred_fallthru
        _
      %p288 = scmp.le.s32.totalorder 1, %s18
      %p289 = scmp.lt.s32.totalorder %s18, 3
      %p290 = pnand %p288, %p289
      %p291 = pneg %p290
      // Predicated region
      $region53: #{block_forward.1} parent=5 // pred_check
        _
      $region54: #{block_forward.1} parent=5 // pred_check_branch
        %293 = sbr.rel (%p290) target = $region56
      $region55: #{block_forward.1} parent=5 // pred_region
        %s294 = ssub.s32 %s18, 1
        %p295 = scmp.lt.s32.totalorder %s23, 1
        %s296 = scalar_select %p295, %s23, 1
        %s297 = smul.addr %s296, 8
        %s298 = scalar_lea.vmem %s0, %s297
        %p299 = pneg %p44
        %p300 = pneg %p41
        %p301 = pneg %p65
        %p302 = pneg %p62
        %p303 = pneg %p86
        %p304 = pneg %p83
        %p305 = pneg %p107
        %p306 = pneg %p104
        %p307 = pneg %p128
        %p308 = pneg %p125
        %p309 = pneg %p149
        %p310 = pneg %p146
        %p311 = pneg %p170
        %p312 = pneg %p167
        %p313 = pneg %p191
        %p314 = pneg %p188
        %p315 = pneg %p212
        %p316 = pneg %p209
        %p317 = pneg %p238
        %p318 = pneg %p235
        %s319 = sand.u32 %s225, 1
        %s320 = scalar_lea.sflag [#allocation3], %s319
        %s321 = sand.u32 %s225, 1
        %s322 = smul.addr %s321, 8
        %s323 = scalar_lea.vmem [#allocation2], %s322
        %p324 = scmp.lt.s32.totalorder %s23, 1
        %s325 = scalar_select %p324, %s23, 1
        %s326 = smul.addr %s325, 8
        %s327 = scalar_lea.vmem %s0, %s326
        %v329 = vld [vmem:[%s327] sm:$0xff]
        %vm330 = vcmask 261120
        %v331 = vsel %vm330, %v329, 0.0
        %332 = vadd.xlane.f32.xlu0 %v331
        %v333 = vpop.xlane.xlu0 %332
        %v334 = vrcp.pop 32.0
        %v335 = vmul.f32 32.0, %v334
        %v336 = vsub.f32 1.0, %v335
        %v337 = vmul.f32 %v334, %v336
        %v338 = vadd.f32 %v334, %v337
        %vm339 = vweird.f32 %v334
        %v340 = vsel %vm339, %v334, %v338
        %v341 = vmul.f32 %v333, %v340
        %v342 = vsub.f32 %v329, %v341
        %v343 = vmul.f32 %v342, %v342
        %v344 = vsel %vm330, %v343, 0.0
        %345 = vadd.xlane.f32.xlu0 %v344
        %v346 = vpop.xlane.xlu0 %345
        %v347 = vmul.f32 %v346, %v340
        %v348 = vadd.f32 %v347, 1e-05
        %v349 = vrsqrt.pop %v348
        %v350 = vmul.f32 %v349, %v348
        %v351 = vmul.f32 %v350, %v349
        %v352 = vmul.f32 0.5, %v351
        %v353 = vsub.f32 1.5, %v352
        %v354 = vmul.f32 %v349, %v353
        %vm355 = vweird.f32 %v348
        %vm356 = vweird.f32 %v349
        %vm357 = vmor %vm355, %vm356
        %v358 = vsel %vm357, %v349, %v354
        %v359 = vmul.f32 %v342, %v358
        %v360 = vpack.c.bf16 %v359, %v359
        %v361 = vld [vmem:[%s1] sm:$0xf]
        %v362 = vld [vmem:[%s1 + $0x4] sm:$0xf]
        %v363 = vld [vmem:[%s1 + $0x8] sm:$0xf]
        %v364 = vld [vmem:[%s1 + $0xc] sm:$0xf]
        %v365 = vld [vmem:[%s2] sm:$0x1]
        %v367 = vperm.slane %v365, 0
        %v373 = vunpack.c.l.b16 %v361
        %v374 = vunpack.c.l.b16 %v362
        %v375 = vunpack.c.l.b16 %v363
        %v376 = vunpack.c.l.b16 %v364
        %v377 = vpack.c.b16 %v374, %v373
        %v378 = vpack.c.b16 %v376, %v375
        %v382 = vsel %vm330, %v360, 0
        %384 = vmatpush.bf16.msra.mxu0 0
        %385 = vmatpush.bf16.msra.mxu0 0
        %386 = vmatpush.bf16.msra.mxu0 0
        %387 = vmatpush.bf16.msra.mxu0 0
        %388 = vmatpush.bf16.msra.mxu0 0
        %389 = vmatpush.bf16.msra.mxu0 0
        %390 = vmatpush.bf16.msra.mxu0 %v378
        %391 = vmatpush.bf16.msra.mxu0 %v377
        %392 = vmatmul.bf16.gmra.mxu0 %v382
        %v393 = vpop.f32.mrf.mxu0
        %v394 = vadd.f32 %v367, %v393
        %v395 = vpop.f32.mrf.mxu0
        %396 = vdwg.mxu0
        %v397 = vld [vmem:[%s3] sm:$0xf]
        %v398 = vld [vmem:[%s3 + $0x4] sm:$0xf]
        %v399 = vld [vmem:[%s3 + $0x8] sm:$0xf]
        %v400 = vld [vmem:[%s3 + $0xc] sm:$0xf]
        %v401 = vld [vmem:[%s4] sm:$0x1]
        %v403 = vperm.slane %v401, 0
        %v405 = vadd.f32 %v329, %v403
        %v406 = vmul.f32 %v394, 0.35355338
        %v407 = vpack.c.bf16 %v406, %v406
        %v408 = vpack.c.bf16 %v394, %v394
        %410 = vrot.lane.b32.xlu0 %v408, 96
        %v411 = vpop.permute.xlu0 %410
        %vm412 = vcmask 64512
        %v414 = vsel %vm412, %v407, 0
        %v417 = vsel %vm412, %v411, 0
        %419 = vmatpush.bf16.xpose.msra.mxu0 0
        %420 = vmatpush.bf16.xpose.msra.mxu0 0
        %421 = vmatpush.bf16.xpose.msra.mxu0 0
        %422 = vmatpush.bf16.xpose.msra.mxu0 0
        %423 = vmatpush.bf16.xpose.msra.mxu0 0
        %424 = vmatpush.bf16.xpose.msra.mxu0 0
        %425 = vmatpush.bf16.xpose.msra.mxu0 0
        %426 = vmatpush.bf16.xpose.msra.mxu0 %v417
        %427 = vmatmul.bf16.gmra.mxu0 %v414
        %v428 = vpop.f32.mrf.mxu0
        %v429 = vadd.f32 0.0, %v428
        %v430 = vpop.f32.mrf.mxu0
        %431 = vdwg.mxu0
        %v432 = vsel %vm412, %v429, -inf
        %433 = vmax.xlane.f32.xlu0 %v432
        %v434 = vpop.xlane.xlu0 %433
        %v435 = vsub.f32 %v429, %v434
        %v436 = vmul.f32 %v435, 1.442695
        %v437 = vpow.pop %v436
        %v438 = vsel %vm412, %v437, 0.0
        %439 = vadd.xlane.f32.xlu0 %v438
        %v440 = vpop.xlane.xlu0 %439
        %v441 = vrcp.pop %v440
        %v442 = vmul.f32 %v437, %v441
        %v443 = vpack.c.bf16 %v442, %v442
        %444 = vrot.lane.b32.xlu0 %v408, 64
        %v445 = vpop.permute.xlu0 %444
        %v447 = vsel %vm412, %v443, 0
        %vm449 = vcmask 1043456
        %v451 = vsel %vm449, %v445, 0
        %453 = vmatpush.bf16.msra.mxu0 0
        %454 = vmatpush.bf16.msra.mxu0 0
        %455 = vmatpush.bf16.msra.mxu0 0
        %456 = vmatpush.bf16.msra.mxu0 0
        %457 = vmatpush.bf16.msra.mxu0 0
        %458 = vmatpush.bf16.msra.mxu0 0
        %459 = vmatpush.bf16.msra.mxu0 0
        %460 = vmatpush.bf16.msra.mxu0 %v451
        %461 = vmatmul.bf16.gmra.mxu0 %v447
        %v462 = vpop.f32.mrf.mxu0
        %v463 = vadd.f32 0.0, %v462
        %v464 = vpop.f32.mrf.mxu0
        %465 = vdwg.mxu0
        %v466 = vpack.c.bf16 %v463, %v463
        %v468 = vsel %vm412, %v466, 0
        %v471 = vsel %vm449, %v397, 0
        %473 = vmatpush.bf16.msra.mxu0 0
        %474 = vmatpush.bf16.msra.mxu0 0
        %475 = vmatpush.bf16.msra.mxu0 0
        %476 = vmatpush.bf16.msra.mxu0 0
        %477 = vmatpush.bf16.msra.mxu0 0
        %478 = vmatpush.bf16.msra.mxu0 0
        %479 = vmatpush.bf16.msra.mxu0 0
        %480 = vmatpush.bf16.msra.mxu0 %v471
        %481 = vmatmul.bf16.gmra.mxu0 %v468
        %v482 = vpop.f32.mrf.mxu0
        %v483 = vadd.f32 0.0, %v482
        %v484 = vpop.f32.mrf.mxu0
        %485 = vdwg.mxu0
        %v486 = vadd.f32 %v405, %v483
        %488 = vrot.lane.b32.xlu0 %v407, 120
        %v489 = vpop.permute.xlu0 %488
        %490 = vrot.lane.b32.xlu0 %v408, 88
        %v491 = vpop.permute.xlu0 %490
        %v493 = vsel %vm412, %v489, 0
        %v496 = vsel %vm412, %v491, 0
        %498 = vmatpush.bf16.xpose.msra.mxu0 0
        %499 = vmatpush.bf16.xpose.msra.mxu0 0
        %500 = vmatpush.bf16.xpose.msra.mxu0 0
        %501 = vmatpush.bf16.xpose.msra.mxu0 0
        %502 = vmatpush.bf16.xpose.msra.mxu0 0
        %503 = vmatpush.bf16.xpose.msra.mxu0 0
        %504 = vmatpush.bf16.xpose.msra.mxu0 0
        %505 = vmatpush.bf16.xpose.msra.mxu0 %v496
        %506 = vmatmul.bf16.gmra.mxu0 %v493
        %v507 = vpop.f32.mrf.mxu0
        %v508 = vadd.f32 0.0, %v507
        %v509 = vpop.f32.mrf.mxu0
        %510 = vdwg.mxu0
        %v511 = vsel %vm412, %v508, -inf
        %512 = vmax.xlane.f32.xlu0 %v511
        %v513 = vpop.xlane.xlu0 %512
        %v514 = vsub.f32 %v508, %v513
        %v515 = vmul.f32 %v514, 1.442695
        %v516 = vpow.pop %v515
        %v517 = vsel %vm412, %v516, 0.0
        %518 = vadd.xlane.f32.xlu0 %v517
        %v519 = vpop.xlane.xlu0 %518
        %v520 = vrcp.pop %v519
        %v521 = vmul.f32 %v516, %v520
        %v522 = vpack.c.bf16 %v521, %v521
        %523 = vrot.lane.b32.xlu0 %v408, 56
        %v524 = vpop.permute.xlu0 %523
        %v526 = vsel %vm412, %v522, 0
        %v529 = vsel %vm449, %v524, 0
        %531 = vmatpush.bf16.msra.mxu0 0
        %532 = vmatpush.bf16.msra.mxu0 0
        %533 = vmatpush.bf16.msra.mxu0 0
        %534 = vmatpush.bf16.msra.mxu0 0
        %535 = vmatpush.bf16.msra.mxu0 0
        %536 = vmatpush.bf16.msra.mxu0 0
        %537 = vmatpush.bf16.msra.mxu0 0
        %538 = vmatpush.bf16.msra.mxu0 %v529
        %539 = vmatmul.bf16.gmra.mxu0 %v526
        %v540 = vpop.f32.mrf.mxu0
        %v541 = vadd.f32 0.0, %v540
        %v542 = vpop.f32.mrf.mxu0
        %543 = vdwg.mxu0
        %v544 = vpack.c.bf16 %v541, %v541
        %v546 = vsel %vm412, %v544, 0
        %v549 = vsel %vm449, %v398, 0
        %551 = vmatpush.bf16.msra.mxu0 0
        %552 = vmatpush.bf16.msra.mxu0 0
        %553 = vmatpush.bf16.msra.mxu0 0
        %554 = vmatpush.bf16.msra.mxu0 0
        %555 = vmatpush.bf16.msra.mxu0 0
        %556 = vmatpush.bf16.msra.mxu0 0
        %557 = vmatpush.bf16.msra.mxu0 0
        %558 = vmatpush.bf16.msra.mxu0 %v549
        %559 = vmatmul.bf16.gmra.mxu0 %v546
        %v560 = vpop.f32.mrf.mxu0
        %v561 = vadd.f32 0.0, %v560
        %v562 = vpop.f32.mrf.mxu0
        %563 = vdwg.mxu0
        %v564 = vadd.f32 %v486, %v561
        %565 = vrot.lane.b32.xlu0 %v407, 112
        %v566 = vpop.permute.xlu0 %565
        %567 = vrot.lane.b32.xlu0 %v408, 80
        %v568 = vpop.permute.xlu0 %567
        %v570 = vsel %vm412, %v566, 0
        %v573 = vsel %vm412, %v568, 0
        %575 = vmatpush.bf16.xpose.msra.mxu0 0
        %576 = vmatpush.bf16.xpose.msra.mxu0 0
        %577 = vmatpush.bf16.xpose.msra.mxu0 0
        %578 = vmatpush.bf16.xpose.msra.mxu0 0
        %579 = vmatpush.bf16.xpose.msra.mxu0 0
        %580 = vmatpush.bf16.xpose.msra.mxu0 0
        %581 = vmatpush.bf16.xpose.msra.mxu0 0
        %582 = vmatpush.bf16.xpose.msra.mxu0 %v573
        %583 = vmatmul.bf16.gmra.mxu0 %v570
        %v584 = vpop.f32.mrf.mxu0
        %v585 = vadd.f32 0.0, %v584
        %v586 = vpop.f32.mrf.mxu0
        %587 = vdwg.mxu0
        %v588 = vsel %vm412, %v585, -inf
        %589 = vmax.xlane.f32.xlu0 %v588
        %v590 = vpop.xlane.xlu0 %589
        %v591 = vsub.f32 %v585, %v590
        %v592 = vmul.f32 %v591, 1.442695
        %v593 = vpow.pop %v592
        %v594 = vsel %vm412, %v593, 0.0
        %595 = vadd.xlane.f32.xlu0 %v594
        %v596 = vpop.xlane.xlu0 %595
        %v597 = vrcp.pop %v596
        %v598 = vmul.f32 %v593, %v597
        %v599 = vpack.c.bf16 %v598, %v598
        %600 = vrot.lane.b32.xlu0 %v408, 48
        %v601 = vpop.permute.xlu0 %600
        %v603 = vsel %vm412, %v599, 0
        %v606 = vsel %vm449, %v601, 0
        %608 = vmatpush.bf16.msra.mxu0 0
        %609 = vmatpush.bf16.msra.mxu0 0
        %610 = vmatpush.bf16.msra.mxu0 0
        %611 = vmatpush.bf16.msra.mxu0 0
        %612 = vmatpush.bf16.msra.mxu0 0
        %613 = vmatpush.bf16.msra.mxu0 0
        %614 = vmatpush.bf16.msra.mxu0 0
        %615 = vmatpush.bf16.msra.mxu0 %v606
        %616 = vmatmul.bf16.gmra.mxu0 %v603
        %v617 = vpop.f32.mrf.mxu0
        %v618 = vadd.f32 0.0, %v617
        %v619 = vpop.f32.mrf.mxu0
        %620 = vdwg.mxu0
        %v621 = vpack.c.bf16 %v618, %v618
        %v623 = vsel %vm412, %v621, 0
        %v626 = vsel %vm449, %v399, 0
        %628 = vmatpush.bf16.msra.mxu0 0
        %629 = vmatpush.bf16.msra.mxu0 0
        %630 = vmatpush.bf16.msra.mxu0 0
        %631 = vmatpush.bf16.msra.mxu0 0
        %632 = vmatpush.bf16.msra.mxu0 0
        %633 = vmatpush.bf16.msra.mxu0 0
        %634 = vmatpush.bf16.msra.mxu0 0
        %635 = vmatpush.bf16.msra.mxu0 %v626
        %636 = vmatmul.bf16.gmra.mxu0 %v623
        %v637 = vpop.f32.mrf.mxu0
        %v638 = vadd.f32 0.0, %v637
        %v639 = vpop.f32.mrf.mxu0
        %640 = vdwg.mxu0
        %v641 = vadd.f32 %v564, %v638
        %642 = vrot.lane.b32.xlu0 %v407, 104
        %v643 = vpop.permute.xlu0 %642
        %644 = vrot.lane.b32.xlu0 %v408, 72
        %v645 = vpop.permute.xlu0 %644
        %v647 = vsel %vm412, %v643, 0
        %v650 = vsel %vm412, %v645, 0
        %652 = vmatpush.bf16.xpose.msra.mxu0 0
        %653 = vmatpush.bf16.xpose.msra.mxu0 0
        %654 = vmatpush.bf16.xpose.msra.mxu0 0
        %655 = vmatpush.bf16.xpose.msra.mxu0 0
        %656 = vmatpush.bf16.xpose.msra.mxu0 0
        %657 = vmatpush.bf16.xpose.msra.mxu0 0
        %658 = vmatpush.bf16.xpose.msra.mxu0 0
        %659 = vmatpush.bf16.xpose.msra.mxu0 %v650
        %660 = vmatmul.bf16.gmra.mxu0 %v647
        %v661 = vpop.f32.mrf.mxu0
        %v662 = vadd.f32 0.0, %v661
        %v663 = vpop.f32.mrf.mxu0
        %664 = vdwg.mxu0
        %v665 = vsel %vm412, %v662, -inf
        %666 = vmax.xlane.f32.xlu0 %v665
        %v667 = vpop.xlane.xlu0 %666
        %v668 = vsub.f32 %v662, %v667
        %v669 = vmul.f32 %v668, 1.442695
        %v670 = vpow.pop %v669
        %v671 = vsel %vm412, %v670, 0.0
        %672 = vadd.xlane.f32.xlu0 %v671
        %v673 = vpop.xlane.xlu0 %672
        %v674 = vrcp.pop %v673
        %v675 = vmul.f32 %v670, %v674
        %v676 = vpack.c.bf16 %v675, %v675
        %677 = vrot.lane.b32.xlu0 %v408, 40
        %v678 = vpop.permute.xlu0 %677
        %v680 = vsel %vm412, %v676, 0
        %v683 = vsel %vm449, %v678, 0
        %685 = vmatpush.bf16.msra.mxu0 0
        %686 = vmatpush.bf16.msra.mxu0 0
        %687 = vmatpush.bf16.msra.mxu0 0
        %688 = vmatpush.bf16.msra.mxu0 0
        %689 = vmatpush.bf16.msra.mxu0 0
        %690 = vmatpush.bf16.msra.mxu0 0
        %691 = vmatpush.bf16.msra.mxu0 0
        %692 = vmatpush.bf16.msra.mxu0 %v683
        %693 = vmatmul.bf16.gmra.mxu0 %v680
        %v694 = vpop.f32.mrf.mxu0
        %v695 = vadd.f32 0.0, %v694
        %v696 = vpop.f32.mrf.mxu0
        %697 = vdwg.mxu0
        %v698 = vpack.c.bf16 %v695, %v695
        %v700 = vsel %vm412, %v698, 0
        %v703 = vsel %vm449, %v400, 0
        %705 = vmatpush.bf16.msra.mxu0 0
        %706 = vmatpush.bf16.msra.mxu0 0
        %707 = vmatpush.bf16.msra.mxu0 0
        %708 = vmatpush.bf16.msra.mxu0 0
        %709 = vmatpush.bf16.msra.mxu0 0
        %710 = vmatpush.bf16.msra.mxu0 0
        %711 = vmatpush.bf16.msra.mxu0 0
        %712 = vmatpush.bf16.msra.mxu0 %v703
        %713 = vmatmul.bf16.gmra.mxu0 %v700
        %v714 = vpop.f32.mrf.mxu0
        %v715 = vadd.f32 0.0, %v714
        %v716 = vpop.f32.mrf.mxu0
        %717 = vdwg.mxu0
        %v718 = vadd.f32 %v641, %v715
        %v719 = vsel %vm330, %v718, 0.0
        %720 = vadd.xlane.f32.xlu0 %v719
        %v721 = vpop.xlane.xlu0 %720
        %v722 = vmul.f32 %v721, %v340
        %v723 = vsub.f32 %v718, %v722
        %v724 = vmul.f32 %v723, %v723
        %v725 = vsel %vm330, %v724, 0.0
        %726 = vadd.xlane.f32.xlu0 %v725
        %v727 = vpop.xlane.xlu0 %726
        %v728 = vmul.f32 %v727, %v340
        %v729 = vadd.f32 %v728, 1e-05
        %v730 = vrsqrt.pop %v729
        %v731 = vmul.f32 %v730, %v729
        %v732 = vmul.f32 %v731, %v730
        %v733 = vmul.f32 0.5, %v732
        %v734 = vsub.f32 1.5, %v733
        %v735 = vmul.f32 %v730, %v734
        %vm736 = vweird.f32 %v729
        %vm737 = vweird.f32 %v730
        %vm738 = vmor %vm736, %vm737
        %v739 = vsel %vm738, %v730, %v735
        %v740 = vmul.f32 %v723, %v739
        %v741 = vpack.c.bf16 %v740, %v740
        %v742 = vld [vmem:[%s5] sm:$0xf]
        %v743 = vld [vmem:[%s5 + $0x4] sm:$0xf]
        %v744 = vld [vmem:[%s5 + $0x8] sm:$0xf]
        %v745 = vld [vmem:[%s5 + $0xc] sm:$0xf]
        %v746 = vld [vmem:[%s6] sm:$0x1]
        %v748 = vperm.slane %v746, 0
        %v754 = vunpack.c.l.b16 %v742
        %v755 = vunpack.c.l.b16 %v743
        %v756 = vunpack.c.l.b16 %v744
        %v757 = vunpack.c.l.b16 %v745
        %v758 = vpack.c.b16 %v755, %v754
        %v759 = vpack.c.b16 %v757, %v756
        %v763 = vsel %vm330, %v741, 0
        %765 = vmatpush.bf16.msra.mxu0 0
        %766 = vmatpush.bf16.msra.mxu0 0
        %767 = vmatpush.bf16.msra.mxu0 0
        %768 = vmatpush.bf16.msra.mxu0 0
        %769 = vmatpush.bf16.msra.mxu0 0
        %770 = vmatpush.bf16.msra.mxu0 0
        %771 = vmatpush.bf16.msra.mxu0 %v759
        %772 = vmatpush.bf16.msra.mxu0 %v758
        %773 = vmatmul.bf16.gmra.mxu0 %v763
        %v774 = vpop.f32.mrf.mxu0
        %v775 = vadd.f32 %v748, %v774
        %v776 = vpop.f32.mrf.mxu0
        %777 = vdwg.mxu0
        %v778 = vmul.f32 %v775, 0.5
        %v779 = vmul.f32 %v775, 0.70710677
        %vm780 = vcmp.lt.f32.partialorder %v779, 0.0
        %v781 = vsel %vm780, -1.0, 1.0
        %v782 = vand.u32 2147483647, %v779
        %v783 = vmul.f32 %v782, 0.3275911
        %v784 = vadd.f32 %v783, 1.0
        %v785 = vrcp.pop %v784
        %v786 = vmul.f32 %v784, %v785
        %v787 = vsub.f32 1.0, %v786
        %v788 = vmul.f32 %v785, %v787
        %v789 = vadd.f32 %v785, %v788
        %vm790 = vweird.f32 %v784
        %vm791 = vweird.f32 %v785
        %vm792 = vmor %vm790, %vm791
        %v793 = vsel %vm792, %v785, %v789
        %v794 = vand.u32 2147483647, %v784
        %vm795 = vcmp.eq.f32.partialorder %v794, 8.507059e+37
        %v796 = vand.u32 %v784, 2147483648
        %v797 = vor.u32 1.1754944e-38, %v796
        %v798 = vsel %vm795, %v797, %v793
        %v799 = vmul.f32 1.0, %v798
        %v800 = vmul.f32 %v799, 1.0614054
        %v801 = vadd.f32 %v800, -1.4531521
        %v802 = vmul.f32 %v801, %v799
        %v803 = vadd.f32 %v802, 1.4214138
        %v804 = vmul.f32 %v803, %v799
        %v805 = vadd.f32 %v804, -0.28449672
        %v806 = vmul.f32 %v805, %v799
        %v807 = vadd.f32 %v806, 0.2548296
        %v808 = vmul.f32 %v807, %v799
        %v809 = vsub.f32 0.0, %v782
        %v810 = vmul.f32 %v809, %v782
        %v811 = vmul.f32 %v810, 1.442695
        %v812 = vpow.pop %v811
        %v813 = vmul.f32 %v808, %v812
        %v814 = vsub.f32 1.0, %v813
        %v815 = vmul.f32 %v781, %v814
        %v816 = vadd.f32 %v815, 1.0
        %v817 = vmul.f32 %v778, %v816
        %v818 = vpack.c.bf16 %v817, %v817
        %v819 = vld [vmem:[%s7] sm:$0xf]
        %v820 = vld [vmem:[%s7 + $0x4] sm:$0xf]
        %v821 = vld [vmem:[%s7 + $0x8] sm:$0xf]
        %v822 = vld [vmem:[%s7 + $0xc] sm:$0xf]
        %v823 = vld [vmem:[%s7 + $0x10] sm:$0xf]
        %v824 = vld [vmem:[%s7 + $0x14] sm:$0xf]
        %v825 = vld [vmem:[%s7 + $0x18] sm:$0xf]
        %v826 = vld [vmem:[%s7 + $0x1c] sm:$0xf]
        %v827 = vld [vmem:[%s7 + $0x20] sm:$0xf]
        %v828 = vld [vmem:[%s7 + $0x24] sm:$0xf]
        %v829 = vld [vmem:[%s7 + $0x28] sm:$0xf]
        %v830 = vld [vmem:[%s7 + $0x2c] sm:$0xf]
        %v831 = vld [vmem:[%s7 + $0x30] sm:$0xf]
        %v832 = vld [vmem:[%s7 + $0x34] sm:$0xf]
        %v833 = vld [vmem:[%s7 + $0x38] sm:$0xf]
        %v834 = vld [vmem:[%s7 + $0x3c] sm:$0xf]
        %v851 = vunpack.c.l.b16 %v819
        %v852 = vunpack.c.l.b16 %v820
        %v853 = vunpack.c.l.b16 %v821
        %v854 = vunpack.c.l.b16 %v822
        %v855 = vunpack.c.l.b16 %v823
        %v856 = vunpack.c.l.b16 %v824
        %v857 = vunpack.c.l.b16 %v825
        %v858 = vunpack.c.l.b16 %v826
        %v859 = vunpack.c.l.b16 %v827
        %v860 = vunpack.c.l.b16 %v828
        %v861 = vunpack.c.l.b16 %v829
        %v862 = vunpack.c.l.b16 %v830
        %v863 = vunpack.c.l.b16 %v831
        %v864 = vunpack.c.l.b16 %v832
        %v865 = vunpack.c.l.b16 %v833
        %v866 = vunpack.c.l.b16 %v834
        %v867 = vpack.c.b16 %v852, %v851
        %v868 = vpack.c.b16 %v854, %v853
        %v869 = vpack.c.b16 %v856, %v855
        %v870 = vpack.c.b16 %v858, %v857
        %v871 = vpack.c.b16 %v860, %v859
        %v872 = vpack.c.b16 %v862, %v861
        %v873 = vpack.c.b16 %v864, %v863
        %v874 = vpack.c.b16 %v866, %v865
        %883 = vmatpush.bf16.msra.mxu0 %v874
        %884 = vmatpush.bf16.msra.mxu0 %v873
        %885 = vmatpush.bf16.msra.mxu0 %v872
        %886 = vmatpush.bf16.msra.mxu0 %v871
        %887 = vmatpush.bf16.msra.mxu0 %v870
        %888 = vmatpush.bf16.msra.mxu0 %v869
        %889 = vmatpush.bf16.msra.mxu0 %v868
        %890 = vmatpush.bf16.msra.mxu0 %v867
        %891 = vmatmul.bf16.gmra.mxu0 %v818
        %v892 = vpop.f32.mrf.mxu0
        %v893 = vadd.f32 0.0, %v892
        %v894 = vpop.f32.mrf.mxu0
        %895 = vdwg.mxu0
        %v896 = vadd.f32 %v329, %v893
        %v897 = vld [vmem:[%s8] sm:$0x1]
        %v899 = vperm.slane %v897, 0
        %v901 = vadd.f32 %v896, %v899
        %902 = vst.msk [vmem:[%s323] sm:$0xff] %vm330, %v901
        %s903 = sand.u32 %s225, 1
        %s904 = scalar_lea.sflag [#allocation3], %s903
        %s905 = sand.u32 %s225, 1
        %s906 = smul.addr %s905, 8
        %s907 = scalar_lea.vmem [#allocation2], %s906
        // Predicated region
        $region57: #{block_forward.1} parent=55 // pred_check
          %p908 = pneg %p235
        $region58: #{block_forward.1} parent=55 // pred_check_branch
          %910 = sbr.rel (%p908) target = $region60
        $region59: #{block_forward.1} parent=55 // pred_region
          %912 = vsyncadd %s904, 0
          %s913 = smul.addr %s23, 8
          %s914 = scalar_lea.hbm %s9, %s913
          %s916 = sshll.u32 %s907, 4
          %s917 = int_to_ptr.vmem [resolvable:$true] %s916
          %s918 = sshll.u32 %s914, 4
          %s919 = int_to_ptr.hbm [resolvable:$true] %s918
          %921 = dma.vmem_to_hbm [thread:$0]  %s917, 128, %s919, %s904
        $region60: #{block_forward.1} parent=55 // pred_fallthru
          _
      $region56: #{block_forward.1} parent=5 // pred_fallthru
        _
      %p922 = scmp.le.s32.totalorder 2, %s18
      // Predicated region
      $region61: #{block_forward.1} parent=5 // pred_check
        %p923 = pneg %p922
      $region62: #{block_forward.1} parent=5 // pred_check_branch
        %925 = sbr.rel (%p923) target = $region64
      $region63: #{block_forward.1} parent=5 // pred_region
        %s926 = ssub.s32 %s18, 2
        // Predicated region
        $region65: #{block_forward.1} parent=63 // pred_check
          %p927 = pneg %p241
        $region66: #{block_forward.1} parent=63 // pred_check_branch
          %929 = sbr.rel (%p927) target = $region68
        $region67: #{block_forward.1} parent=63 // pred_region
          %s930 = sand.u32 %s226, 1
          %s931 = scalar_lea.sflag [#allocation3], %s930
          %s932 = sand.u32 %s226, 1
          %s933 = smul.addr %s932, 8
          %s934 = scalar_lea.vmem [#allocation2], %s933
          %936 = dma.done %s931, 128
        $region68: #{block_forward.1} parent=63 // pred_fallthru
          _
      $region64: #{block_forward.1} parent=5 // pred_fallthru
        _
    $region6: #{block_forward.1} parent=1 // loop_footer
      %s22 = sadd.s32 1, %s18
    $region7: #{block_forward.1} parent=1 // loop_footer_branch
      %17 = sbr.rel target = $region3
    $region8: #{block_forward.1} parent=1 // loop_exit
      _
    %937 = vsyncpa [#allocation3], 1
    %s938 = scalar_lea.sflag [#allocation3], 1
    %939 = vsyncpa %s938, 1

</llo_original>
